<compile_context>
chip_gen: v7x
topology: tpu7x:2x2x1
jax: 0.10.0
libtpu: 0.0.40
codegen_flags: <defaults>
</compile_context>

<pallas_src>
import jax
import jax.numpy as jnp
from jax.experimental import pallas as pl
from jax.experimental.pallas import tpu as pltpu


# ----------------------------- kernel ---------------------------------------


def _make_sum_kernel(n_parts, acc_dtype):
    def kernel(*refs):
        in_refs = refs[:n_parts]
        o_ref = refs[n_parts]
        acc = in_refs[0][...].astype(acc_dtype)
        for r in in_refs[1:]:
            acc = acc + r[...].astype(acc_dtype)
        o_ref[...] = acc.astype(o_ref.dtype)

    return kernel


# --------------------------- helpers -----------------------------------------


def _acc_dtype(dtype):
    dt = jnp.dtype(dtype)
    if jnp.issubdtype(dt, jnp.floating):
        return jnp.float32
    if jnp.issubdtype(dt, jnp.integer):
        # NOTE: torch.sum(stack(int8)) promotes to int64; here we accumulate in
        # int32 and cast back to the input dtype (common NN-accumulator usage).
        return jnp.int32
    return dt


def _sublane_multiple(itemsize):
    # f32 -> 8, bf16 -> 16, int8/fp8 -> 32 (sub-32-bit dtypes pack along sublanes).
    return max(8, 32 // max(1, itemsize))


def _cdiv(a, b):
    return -(-a // b)


_VMEM_CONFIG_CACHE = []


def _vmem_config():
    """Return (vmem_limit_bytes, tile_budget_bytes, max_parts_per_call)."""
    if _VMEM_CONFIG_CACHE:
        return _VMEM_CONFIG_CACHE[0]
    conservative = (32 * 1024 * 1024, 24 * 1024 * 1024, 16)  # v7x (64 MiB VMEM) / unknown
    big = (64 * 1024 * 1024, 48 * 1024 * 1024, 32)           # v5e / v6e (128 MiB VMEM)
    cfg = conservative
    try:
        cap = getattr(pltpu.get_tpu_info(), "vmem_capacity_bytes", None)
        if cap is not None:
            cfg = big if cap >= 100 * 1024 * 1024 else conservative
            _VMEM_CONFIG_CACHE.append(cfg)
            return cfg
    except Exception:
        pass
    try:
        kind = jax.devices()[0].device_kind.lower()
        if "v5" in kind or "v6" in kind:
            cfg = big
    except Exception:
        pass
    _VMEM_CONFIG_CACHE.append(cfg)
    return cfg


def _plan_cols(bulk):
    """Widest lane-dense column count (multiple of 128) that divides `bulk`."""
    for cand in (8192, 4096, 2048, 1024, 512, 256, 128):
        if bulk % cand == 0:
            return cand
    return 128  # unreachable: bulk is always a multiple of 128


def _choose_tile_rows(rows, cols, n_parts, itemsize, budget_bytes):
    sub = _sublane_multiple(itemsize)
    if rows <= 2 * sub:
        return rows  # too small to pipeline; single full-slab block

    # VMEM budget: (N inputs + 1 output), each double-buffered by the pipeline.
    bytes_per_row = (n_parts + 1) * 2 * cols * itemsize
    tr_budget = budget_bytes // bytes_per_row
    # Cap each per-part DMA at ~4 MiB (amortizes the ~0.35us per-step overhead
    # without blowing the budget for long part lists).
    tr_dma = (4 * 1024 * 1024) // (cols * itemsize)
    tr_max = max(sub, (min(tr_budget, tr_dma) // sub) * sub)

    # Never collapse to a single block: target >= 4 grid steps (software
    # pipelining + >=2 tiles per TensorCore on v7x), rounded to an even count.
    steps = max(4, _cdiv(rows, tr_max))
    if steps % 2:
        steps += 1
    tr = max(sub, (_cdiv(rows, steps) // sub) * sub)
    tr = min(tr, tr_max)

    # Nudge the tile so the realized step count is even (v7x megacore balance).
    def n_steps(t):
        return _cdiv(rows, t)

    if n_steps(tr) % 2:
        cands = [tr + d * sub for d in (-3, -2, -1, 1, 2, 3)]
        cands = [t for t in cands
                 if sub <= t <= tr_max and t < rows and n_steps(t) % 2 == 0]
        if cands:
            tr = max(cands)
    return tr


# ---------------------------- pallas wrapper ---------------------------------


def _sum_parts_pallas(parts_2d, budget_bytes, vmem_limit_bytes):
    n = len(parts_2d)
    rows, cols = parts_2d[0].shape
    dtype = parts_2d[0].dtype
    itemsize = jnp.dtype(dtype).itemsize
    acc_dtype = _acc_dtype(dtype)
    tr = _choose_tile_rows(rows, cols, n, itemsize, budget_bytes)

    cost = pl.CostEstimate(
        flops=(n - 1) * rows * cols,
        transcendentals=0,
        bytes_accessed=(n + 1) * rows * cols * itemsize,
    )

    return pl.pallas_call(
        _make_sum_kernel(n, acc_dtype),
        out_shape=jax.ShapeDtypeStruct((rows, cols), dtype),
        grid_spec=pltpu.PrefetchScalarGridSpec(
            num_scalar_prefetch=0,
            grid=(pl.cdiv(rows, tr),),
            in_specs=[pl.BlockSpec((tr, cols), lambda i: (i, 0)) for _ in range(n)],
            out_specs=pl.BlockSpec((tr, cols), lambda i: (i, 0)),
        ),
        compiler_params=pltpu.CompilerParams(
            dimension_semantics=("parallel",),  # row tiles shard across TCs (v7x)
            vmem_limit_bytes=vmem_limit_bytes,
        ),
        cost_estimate=cost,
    )(*parts_2d)


def accumulator_forward(parts):
    """JAX/Pallas equivalent of Accumulator.forward with agg_fn=torch.sum.

    parts: list of arrays (or None entries). All non-None parts share
    shape/dtype. Returns None if no non-None parts, else their elementwise sum.
    """
    parts = [p for p in parts if p is not None]
    if len(parts) == 0:
        return None
    if len(parts) == 1:
        return parts[0]

    orig_shape = parts[0].shape
    dtype = jnp.dtype(parts[0].dtype)
    acc_dt = _acc_dtype(dtype)
    total = 1
    for d in orig_shape:
        total *= d
    if total == 0:
        return parts[0]

    vmem_limit, budget, max_parts_per_call = _vmem_config()

    flat_parts = [p.reshape(-1) for p in parts]
    rem = total % 128
    bulk = total - rem

    if bulk == 0:
        # Fewer than 128 elements: a kernel launch costs more than the math.
        acc = flat_parts[0].astype(acc_dt)
        for fp in flat_parts[1:]:
            acc = acc + fp.astype(acc_dt)
        return acc.astype(dtype).reshape(orig_shape)

    cols = _plan_cols(bulk)
    rows = bulk // cols

    def to2d(fp):
        if rem:
            fp = fp[:bulk]
        return fp.reshape(rows, cols)

    parts2d = [to2d(fp) for fp in flat_parts]

    # Bound the number of inputs per pallas_call (keeps double-buffered tiles
    # within the VMEM budget for very long part lists).
    # TODO(synk): for N > max_parts_per_call a single-pass manual pipeline
    # (pl.ANY inputs + make_async_copy double-buffering into a resident
    # accumulator) would remove the extra partial-sum HBM write+read per chunk.
    while len(parts2d) > 1:
        chunk, rest = parts2d[:max_parts_per_call], parts2d[max_parts_per_call:]
        parts2d = [_sum_parts_pallas(chunk, budget, vmem_limit)] + rest

    out_flat = parts2d[0].reshape(-1)
    if rem:
        tail = flat_parts[0][bulk:].astype(acc_dt)
        for fp in flat_parts[1:]:
            tail = tail + fp[bulk:].astype(acc_dt)
        out_flat = jnp.concatenate([out_flat, tail.astype(dtype)])
    return out_flat.reshape(orig_shape)


# ------------------------------- tests ---------------------------------------


if __name__ == "__main__":
    key = jax.random.PRNGKey(0)
    k1, k2, k3 = jax.random.split(key, 3)

    # 1) Basic NCHW case (with a None entry, mirroring the module's filtering).
    shape = (2, 4, 16, 16)
    p1 = jax.random.normal(k1, shape, dtype=jnp.float32)
    p2 = jax.random.normal(k2, shape, dtype=jnp.float32)
    p3 = jax.random.normal(k3, shape, dtype=jnp.float32)
    out = jax.block_until_ready(accumulator_forward([p1, None, p2, p3]))
    assert out.shape == shape and out.dtype == p1.dtype
    assert jnp.allclose(out, p1 + p2 + p3, atol=1e-5, rtol=1e-5)

    # 2) Tiny odd size (< 128 elements) -> pure-jnp path.
    shape2 = (3, 5, 7)
    q1 = jax.random.normal(k1, shape2, dtype=jnp.float32)
    q2 = jax.random.normal(k2, shape2, dtype=jnp.float32)
    out2 = jax.block_until_ready(accumulator_forward([q1, None, q2]))
    assert out2.shape == shape2
    assert jnp.allclose(out2, q1 + q2, atol=1e-5, rtol=1e-5)

    # 3) Non-multiple-of-128 element count -> kernel on the aligned bulk + jnp tail.
    shape3 = (5, 300)
    r1 = jax.random.normal(k1, shape3, dtype=jnp.float32)
    r2 = jax.random.normal(k2, shape3, dtype=jnp.float32)
    r3 = jax.random.normal(k3, shape3, dtype=jnp.float32)
    out3 = jax.block_until_ready(accumulator_forward([r1, r2, r3]))
    assert out3.shape == shape3
    assert jnp.allclose(out3, r1 + r2 + r3, atol=1e-5, rtol=1e-5)

    # 4) Larger f32 slab -> multi-tile pipelined grid (>= 4 even steps).
    shape4 = (16, 256, 128)
    keys4 = jax.random.split(jax.random.PRNGKey(1), 3)
    s_parts = [jax.random.normal(k, shape4, dtype=jnp.float32) for k in keys4]
    out4 = jax.block_until_ready(accumulator_forward(s_parts))
    ref4 = s_parts[0] + s_parts[1] + s_parts[2]
    assert jnp.allclose(out4, ref4, atol=1e-4, rtol=1e-5)

    # 5) bf16 parts (f32 accumulation, sublane multiple of 16).
    shape5 = (8, 512, 128)
    keys5 = jax.random.split(jax.random.PRNGKey(2), 5)
    b_parts = [jax.random.normal(k, shape5, dtype=jnp.bfloat16) for k in keys5]
    out5 = jax.block_until_ready(accumulator_forward(b_parts))
    ref5 = b_parts[0].astype(jnp.float32)
    for t in b_parts[1:]:
        ref5 = ref5 + t.astype(jnp.float32)
    assert out5.dtype == jnp.bfloat16
    assert jnp.allclose(out5.astype(jnp.float32), ref5, atol=1e-1, rtol=5e-2)

    # 6) Long part list -> chained pallas_call reduction path.
    keys6 = jax.random.split(jax.random.PRNGKey(3), 34)
    m_parts = [jax.random.normal(k, (64, 128), dtype=jnp.float32) for k in keys6]
    out6 = jax.block_until_ready(accumulator_forward(m_parts))
    ref6 = m_parts[0]
    for t in m_parts[1:]:
        ref6 = ref6 + t
    assert jnp.allclose(out6, ref6, atol=1e-3, rtol=1e-5)

    # 7) Empty case returns None, like the PyTorch module.
    assert accumulator_forward([None, None]) is None

    print("KERNEL_OK")
</pallas_src>

<mosaic_0001>
module attributes {stable_mosaic.version = 11 : i64} {
  func.func @kernel(%arg0: i32, %arg1: memref<1x2048xf32, #tpu.memory_space<vmem>>, %arg2: memref<1x2048xf32, #tpu.memory_space<vmem>>, %arg3: memref<1x2048xf32, #tpu.memory_space<vmem>>, %arg4: memref<1x2048xf32, #tpu.memory_space<vmem>>) attributes {dimension_semantics = [#tpu.dimension_semantics<parallel>], iteration_bounds = array<i64: 1>, scalar_prefetch = 0 : i64, scratch_operands = 0 : i64, tpu.core_type = #tpu.core_type<tc>, window_params = [{transform_indices = @transform_0, window_bounds = array<i64: 1, 2048>}, {transform_indices = @transform_1, window_bounds = array<i64: 1, 2048>}, {transform_indices = @transform_2, window_bounds = array<i64: 1, 2048>}, {transform_indices = @transform_3, window_bounds = array<i64: 1, 2048>}]} {
    %c0 = arith.constant 0 : index
    %c0_0 = arith.constant 0 : index
    %0 = vector.load %arg1[%c0, %c0_0] : memref<1x2048xf32, #tpu.memory_space<vmem>>, vector<1x2048xf32>
    %c0_1 = arith.constant 0 : index
    %c0_2 = arith.constant 0 : index
    %1 = vector.load %arg2[%c0_1, %c0_2] : memref<1x2048xf32, #tpu.memory_space<vmem>>, vector<1x2048xf32>
    %2 = arith.addf %0, %1 : vector<1x2048xf32>
    %c0_3 = arith.constant 0 : index
    %c0_4 = arith.constant 0 : index
    %3 = vector.load %arg3[%c0_3, %c0_4] : memref<1x2048xf32, #tpu.memory_space<vmem>>, vector<1x2048xf32>
    %4 = arith.addf %2, %3 : vector<1x2048xf32>
    %c0_5 = arith.constant 0 : index
    %c0_6 = arith.constant 0 : index
    %5 = vector.load %arg4[%c0_5, %c0_6] : memref<1x2048xf32, #tpu.memory_space<vmem>>, vector<1x2048xf32>
    tpu.vector_store %arg4[%c0_5, %c0_6], %4 {strides = array<i32>} : memref<1x2048xf32, #tpu.memory_space<vmem>>, vector<1x2048xf32>,
    return
  }
  func.func @transform_0(%arg0: i32) -> (i32, i32) {
    %c0_i32 = arith.constant 0 : i32
    %c0_i32_0 = arith.constant 0 : i32
    return %arg0, %c0_i32 : i32, i32
  }
  func.func @transform_1(%arg0: i32) -> (i32, i32) {
    %c0_i32 = arith.constant 0 : i32
    %c0_i32_0 = arith.constant 0 : i32
    return %arg0, %c0_i32 : i32, i32
  }
  func.func @transform_2(%arg0: i32) -> (i32, i32) {
    %c0_i32 = arith.constant 0 : i32
    %c0_i32_0 = arith.constant 0 : i32
    return %arg0, %c0_i32 : i32, i32
  }
  func.func @transform_3(%arg0: i32) -> (i32, i32) {
    %c0_i32 = arith.constant 0 : i32
    %c0_i32_0 = arith.constant 0 : i32
    return %arg0, %c0_i32 : i32, i32
  }
}

</mosaic_0001>

<llo_original>
// kernel: tpu_custom_call.1
$region0: #{tpu_custom_call.1}
  #allocation0 [shape = 'u32[]', space=smem, size = 0x4, offset = 0x4, fixed_abs, tag = 'smem constant byte address 0x4 - core index']
  #allocation1 [shape = 'u32[144,128]{1,0:T(1,128)}', space=vmem, size = 0x12000, scoped, tag = 'internal scratch']
  %s0 = inlined_call_operand.hbm [shape: f32[1,2048], index: 0, kind: input, shape index: {}]
  %s1 = inlined_call_operand.hbm [shape: f32[1,2048], index: 1, kind: input, shape index: {}]
  %s2 = inlined_call_operand.hbm [shape: f32[1,2048], index: 2, kind: input, shape index: {}]
  %s3 = inlined_call_operand.hbm [shape: f32[1,2048], index: 3, kind: output, shape index: {}]
  %s4 = sld [smem:[#allocation0]]
  $region34: #{tpu_custom_call.1} parent=0
    _
  %s6 = ssub.s32 1, %s4
  %s7 = scalar_select 0, %s6, %s4
  $region1: #{tpu_custom_call.1} parent=0
    #allocation2 [shape = 'u8[8192]{0}', space=vmem, size = 0x2000, scoped, tag = 'input window, operand 0, single buffered']
    #allocation3 [shape = 's32[1]{0}', space=sflag, size = 0x4, scoped, tag = 'scoped memory for tpu_custom_call.1']
    #allocation4 [shape = 's32[1]{0}', space=sflag, size = 0x4, scoped, tag = 'scoped memory for tpu_custom_call.1']
    #allocation5 [shape = 'u8[8192]{0}', space=vmem, size = 0x2000, scoped, tag = 'input window, operand 1, single buffered']
    #allocation6 [shape = 's32[1]{0}', space=sflag, size = 0x4, scoped, tag = 'scoped memory for tpu_custom_call.1']
    #allocation7 [shape = 'u8[8192]{0}', space=vmem, size = 0x2000, scoped, tag = 'input window, operand 2, single buffered']
    #allocation8 [shape = 'u8[8192]{0}', space=vmem, size = 0x2000, scoped, tag = 'output window, operand 0, single buffered']
    %8 = vsyncpa [#allocation3], 0
    %9 = vsyncpa [#allocation6], 0
    %10 = vsyncpa [#allocation4], 0
    // Predicated region
    $region2: #{tpu_custom_call.1} parent=1 // pred_check
      _
    $region3: #{tpu_custom_call.1} parent=1 // pred_check_branch
      %12 = sbr.rel (0) target = $region5
    $region4: #{tpu_custom_call.1} parent=1 // pred_region
      %s14 = ssub.s32 256, 256
      %15 = vsyncadd [#allocation3], %s14
      %s17 = sshll.u32 [#allocation2], 4
      %s18 = int_to_ptr.vmem [resolvable:$true] %s17
      %20 = dma.hbm_to_vmem [thread:$0]  %s0, 256, %s18, [#allocation3]
    $region5: #{tpu_custom_call.1} parent=1 // pred_fallthru
      _
    // Predicated region
    $region6: #{tpu_custom_call.1} parent=1 // pred_check
      _
    $region7: #{tpu_custom_call.1} parent=1 // pred_check_branch
      %22 = sbr.rel (0) target = $region9
    $region8: #{tpu_custom_call.1} parent=1 // pred_region
      %s24 = ssub.s32 256, 256
      %25 = vsyncadd [#allocation6], %s24
      %s27 = sshll.u32 [#allocation5], 4
      %s28 = int_to_ptr.vmem [resolvable:$true] %s27
      %30 = dma.hbm_to_vmem [thread:$0]  %s1, 256, %s28, [#allocation6]
    $region9: #{tpu_custom_call.1} parent=1 // pred_fallthru
      _
    // Predicated region
    $region10: #{tpu_custom_call.1} parent=1 // pred_check
      _
    $region11: #{tpu_custom_call.1} parent=1 // pred_check_branch
      %32 = sbr.rel (0) target = $region13
    $region12: #{tpu_custom_call.1} parent=1 // pred_region
      %s34 = ssub.s32 256, 256
      %35 = vsyncadd [#allocation6], %s34
      %s37 = sshll.u32 [#allocation7], 4
      %s38 = int_to_ptr.vmem [resolvable:$true] %s37
      %40 = dma.hbm_to_vmem [thread:$0]  %s2, 256, %s38, [#allocation6]
    $region13: #{tpu_custom_call.1} parent=1 // pred_fallthru
      _
    // Predicated region
    $region14: #{tpu_custom_call.1} parent=1 // pred_check
      _
    $region15: #{tpu_custom_call.1} parent=1 // pred_check_branch
      %42 = sbr.rel (0) target = $region17
    $region16: #{tpu_custom_call.1} parent=1 // pred_region
      %43 = dma.done [#allocation3], 256
    $region17: #{tpu_custom_call.1} parent=1 // pred_fallthru
      _
    // Predicated region
    $region18: #{tpu_custom_call.1} parent=1 // pred_check
      _
    $region19: #{tpu_custom_call.1} parent=1 // pred_check_branch
      %45 = sbr.rel (0) target = $region21
    $region20: #{tpu_custom_call.1} parent=1 // pred_region
      %46 = dma.done [#allocation6], 256
    $region21: #{tpu_custom_call.1} parent=1 // pred_fallthru
      _
    // Predicated region
    $region22: #{tpu_custom_call.1} parent=1 // pred_check
      _
    $region23: #{tpu_custom_call.1} parent=1 // pred_check_branch
      %48 = sbr.rel (0) target = $region25
    $region24: #{tpu_custom_call.1} parent=1 // pred_region
      %49 = dma.done [#allocation6], 256
    $region25: #{tpu_custom_call.1} parent=1 // pred_fallthru
      _
    %v50 = vld [vmem:[#allocation2] sm:$0xff]
    %v51 = vld [vmem:[#allocation2 + $0x8] sm:$0xff]
    %v52 = vld [vmem:[#allocation5] sm:$0xff]
    %v53 = vld [vmem:[#allocation5 + $0x8] sm:$0xff]
    %v54 = vadd.f32 %v50, %v52
    %v55 = vadd.f32 %v51, %v53
    %v56 = vld [vmem:[#allocation7] sm:$0xff]
    %v57 = vld [vmem:[#allocation7 + $0x8] sm:$0xff]
    %v58 = vadd.f32 %v54, %v56
    %v59 = vadd.f32 %v55, %v57
    %60 = vst [vmem:[#allocation8] sm:$0xff] %v58
    %61 = vst [vmem:[#allocation8 + $0x8] sm:$0xff] %v59
    // Predicated region
    $region26: #{tpu_custom_call.1} parent=1 // pred_check
      _
    $region27: #{tpu_custom_call.1} parent=1 // pred_check_branch
      %63 = sbr.rel (0) target = $region29
    $region28: #{tpu_custom_call.1} parent=1 // pred_region
      %s65 = ssub.s32 256, 256
      %66 = vsyncadd [#allocation4], %s65
      %s68 = sshll.u32 [#allocation8], 4
      %s69 = int_to_ptr.vmem [resolvable:$true] %s68
      %71 = dma.vmem_to_hbm [thread:$0]  %s69, 256, %s3, [#allocation4]
    $region29: #{tpu_custom_call.1} parent=1 // pred_fallthru
      _
    // Predicated region
    $region30: #{tpu_custom_call.1} parent=1 // pred_check
      _
    $region31: #{tpu_custom_call.1} parent=1 // pred_check_branch
      %73 = sbr.rel (0) target = $region33
    $region32: #{tpu_custom_call.1} parent=1 // pred_region
      %74 = dma.done [#allocation4], 256
    $region33: #{tpu_custom_call.1} parent=1 // pred_fallthru
      _
    %75 = vsyncpa [#allocation3], 1
    %76 = vsyncpa [#allocation6], 1
    %77 = vsyncpa [#allocation4], 1

</llo_original>
